<compile_context>
chip_gen: v7x
topology: tpu7x:2x2x1
jax: 0.10.0
libtpu: 0.0.40
codegen_flags: <defaults>
</compile_context>

<pallas_src>
import numpy as np

import jax
import jax.numpy as jnp
from jax import lax
from jax.experimental import pallas as pl
from jax.experimental.pallas import tpu as pltpu


def _round_up(n, m):
    return ((n + m - 1) // m) * m


# ----------------------------------------------------------------------------
# Fused kernel:  out = relu(relu(relu(relu(x@W1+b1)@W2+b2)@W3+b3)@W4+b4)
# ----------------------------------------------------------------------------
def _make_kernel(compute_dtype):
    def kernel(x_ref, w1_ref, b1_ref, w2_ref, b2_ref, w3_ref, b3_ref,
               w4_ref, b4_ref, o_ref):
        def layer(h, w_ref, b_ref):
            acc = jnp.dot(h.astype(compute_dtype), w_ref[...],
                          preferred_element_type=jnp.float32)   # f32 accumulate
            return jnp.maximum(acc + b_ref[...], 0.0)            # f32 epilogue

        h = layer(x_ref[...], w1_ref, b1_ref)   # conv1 (folded Toeplitz) + ReLU
        h = layer(h, w2_ref, b2_ref)            # conv2 (folded Toeplitz) + ReLU
        h = layer(h, w3_ref, b3_ref)            # fc1                    + ReLU
        h = layer(h, w4_ref, b4_ref)            # fc2                    + ReLU
        o_ref[...] = h.astype(o_ref.dtype)
    return kernel


def _target_block_rows():
    """Device-aware batch-tile target (safe fallback = 1024 rows)."""
    try:
        # v7x-class: 64 MiB VMEM per core, ~3.2 TB/s HBM -> bigger tiles to
        # amortise the fixed per-grid-step overhead.
        if pltpu.get_tpu_info().vmem_capacity_bytes <= (64 << 20):
            return 2048
    except Exception:
        pass
    return 1024        # v5e (16 MiB scoped default) / v6e (32 MiB): plenty of headroom


def _pick_block_rows(batch):
    """Fixed, bounded batch tile (multiple of 8); never degenerates to bt=B."""
    if batch <= 8:
        return batch                       # single full block for tiny batches
    bt = min(_target_block_rows(), _round_up(batch, 8))
    # Keep >= 2 grid steps when possible: shards the "parallel" axis across
    # both TensorCores on dual-core chips and gives the pipeline overlap work.
    bt = min(bt, _round_up(-(-batch // 2), 8))
    return max(bt, 8)


def actor_forward(state, kp):
    """state: (B, 1, H, W) float32 (PyTorch NCHW).  kp: prepare_params(...)."""
    B = state.shape[0]
    x = state.reshape(B, -1)      # C == 1, so NCHW flatten == (iy, ix) row-major (no copy)
    n_in = x.shape[1]
    n_act = kp["w4"].shape[1]
    bt = _pick_block_rows(B)

    row = lambda i: (i, 0)        # batch-tiled arrays
    pin = lambda i: (0, 0)        # weights/biases: block index never changes ->
                                  # fetched once, VMEM-resident across the grid

    return pl.pallas_call(
        _make_kernel(kp["w1"].dtype),
        out_shape=jax.ShapeDtypeStruct((B, n_act), jnp.float32),
        grid=(pl.cdiv(B, bt),),   # partial tail tile: OOB reads padded, OOB writes dropped
        in_specs=[
            pl.BlockSpec((bt, n_in), row),
            pl.BlockSpec(kp["w1"].shape, pin), pl.BlockSpec(kp["b1"].shape, pin),
            pl.BlockSpec(kp["w2"].shape, pin), pl.BlockSpec(kp["b2"].shape, pin),
            pl.BlockSpec(kp["w3"].shape, pin), pl.BlockSpec(kp["b3"].shape, pin),
            pl.BlockSpec(kp["w4"].shape, pin), pl.BlockSpec(kp["b4"].shape, pin),
        ],
        out_specs=pl.BlockSpec((bt, n_act), row),
        compiler_params=pltpu.CompilerParams(dimension_semantics=("parallel",)),
    )(x, kp["w1"], kp["b1"], kp["w2"], kp["b2"],
      kp["w3"], kp["b3"], kp["w4"], kp["b4"])


# ----------------------------------------------------------------------------
# One-time, weight-side folding into kernel-ready (lane-dense) layouts.
# ----------------------------------------------------------------------------
def _conv_fold_index(in_h, in_w, in_c, k, stride, out_c):
    """Index table mapping a VALID strided conv to a dense (n_in, n_out) matmul.

    Input features are NHWC-flattened ((iy, ix, ci) order), output features are
    ((oy, ox, co)).  Entry = flat index into the torch OIHW weight, or a
    trailing zero-slot where the receptive fields do not overlap.
    """
    oh = (in_h - k) // stride + 1
    ow = (in_w - k) // stride + 1
    zero_slot = out_c * in_c * k * k
    idx = np.full((in_h * in_w * in_c, oh * ow * out_c), zero_slot, dtype=np.int32)
    for oy in range(oh):
        for ox in range(ow):
            for ky in range(k):
                for kx in range(k):
                    iy, ix = oy * stride + ky, ox * stride + kx
                    for ci in range(in_c):
                        i = (iy * in_w + ix) * in_c + ci
                        for co in range(out_c):
                            j = (oy * ow + ox) * out_c + co
                            idx[i, j] = ((co * in_c + ci) * k + ky) * k + kx
    return idx, oh, ow


def _pad2(a, rows, cols):
    return jnp.pad(a, ((0, rows - a.shape[0]), (0, cols - a.shape[1])))


def prepare_params(params, state_size, compute_dtype=jnp.bfloat16):
    """Fold PyTorch-shaped params into kernel-ready, lane-dense matrices."""
    H, W = state_size
    idx1, oh1, ow1 = _conv_fold_index(H, W, 1, 4, 2, 4)
    idx2, oh2, ow2 = _conv_fold_index(oh1, ow1, 4, 3, 2, 16)
    hid = params["fc1_w"].shape[0]
    n_act = params["fc2_w"].shape[0]
    n_pos2 = oh2 * ow2
    d1, d2 = oh1 * ow1 * 4, 16 * n_pos2                 # 196, 144 for 16x16 input
    # Zero-pad internal feature widths to multiples of 128: unmasked lane tiles
    # and clean MXU shapes.  Padding is inert (relu(0@0+0)=0, zero weight rows
    # contribute nothing).  The final action width stays unpadded.
    d1p, d2p, hp = _round_up(d1, 128), _round_up(d2, 128), _round_up(hid, 128)

    def fold(w, idx):
        table = jnp.concatenate([w.reshape(-1), jnp.zeros((1,), w.dtype)])
        return table[jnp.asarray(idx)]

    w1 = _pad2(fold(params["conv1_w"], idx1), H * W, d1p)      # (H*W, d1p)
    w2 = _pad2(fold(params["conv2_w"], idx2), d1p, d2p)        # (d1p, d2p)
    # fc1: torch (hid, conv_out) with input order (c, oy, ox) -> (conv_out, hid)
    # with input order (oy, ox, c) to match the kernel's NHWC-flattened conv2 output.
    w3 = jnp.transpose(params["fc1_w"].reshape(hid, 16, n_pos2), (2, 1, 0)).reshape(d2, hid)
    w3 = _pad2(w3, d2p, hp)                                     # (d2p, hp)
    w4 = _pad2(params["fc2_w"].T, hp, n_act)                    # (hp, n_act) — output NOT padded

    pad1 = lambda v, n: jnp.pad(v, (0, n - v.shape[0])).reshape(1, -1)
    return {
        "w1": w1.astype(compute_dtype),
        "b1": pad1(jnp.tile(params["conv1_b"], oh1 * ow1), d1p),
        "w2": w2.astype(compute_dtype),
        "b2": pad1(jnp.tile(params["conv2_b"], n_pos2), d2p),
        "w3": w3.astype(compute_dtype),
        "b3": pad1(params["fc1_b"], hp),
        "w4": w4.astype(compute_dtype),
        "b4": params["fc2_b"].reshape(1, -1),
    }


# ----------------------------------------------------------------------------
# Pure-JAX reference (direct transcription of the PyTorch module) + init
# ----------------------------------------------------------------------------
def actor_forward_reference(state, params):
    dn = ("NCHW", "OIHW", "NCHW")
    x = lax.conv_general_dilated(state, params["conv1_w"], (2, 2), "VALID",
                                 dimension_numbers=dn)
    x = jax.nn.relu(x + params["conv1_b"].reshape(1, -1, 1, 1))
    x = lax.conv_general_dilated(x, params["conv2_w"], (2, 2), "VALID",
                                 dimension_numbers=dn)
    x = jax.nn.relu(x + params["conv2_b"].reshape(1, -1, 1, 1))
    x = x.reshape(x.shape[0], -1)                    # channel-major NCHW flatten
    x = jax.nn.relu(x @ params["fc1_w"].T + params["fc1_b"])
    x = jax.nn.relu(x @ params["fc2_w"].T + params["fc2_b"])
    return x


def init_params(key, state_size, action_size, hidden_layers):
    H, W = state_size
    oh1, ow1 = (H - 4) // 2 + 1, (W - 4) // 2 + 1
    oh2, ow2 = (oh1 - 3) // 2 + 1, (ow1 - 3) // 2 + 1
    conv_out = 16 * oh2 * ow2
    hidden0, hidden_last = hidden_layers[0], hidden_layers[-1]

    ks = jax.random.split(key, 8)
    u = lambda k, shape, s: jax.random.uniform(k, shape, jnp.float32, -s, s)
    return {
        # PyTorch-native shapes (Conv: OIHW, Linear: (out, in))
        "conv1_w": u(ks[0], (4, 1, 4, 4), 0.25),
        "conv1_b": u(ks[1], (4,), 0.25),
        "conv2_w": u(ks[2], (16, 4, 3, 3), 0.16),
        "conv2_b": u(ks[3], (16,), 0.16),
        "fc1_w": u(ks[4], (hidden0, conv_out), 0.08),
        "fc1_b": u(ks[5], (hidden0,), 0.08),
        "fc2_w": u(ks[6], (action_size, hidden_last), 0.17),
        "fc2_b": u(ks[7], (action_size,), 0.17),
    }


if __name__ == "__main__":
    key = jax.random.PRNGKey(0)
    k_x, k_p = jax.random.split(key)

    state_size = (16, 16)
    action_size = 6
    hidden_layers = [32]
    batch = 2

    params = init_params(k_p, state_size, action_size, hidden_layers)
    kp = prepare_params(params, state_size)            # weight folding: outside hot path
    fwd = jax.jit(actor_forward)

    state = jax.random.normal(k_x, (batch, 1, *state_size), dtype=jnp.float32)
    out = jax.block_until_ready(fwd(state, kp))

    # Correctness vs. plain-JAX transcription of the torch module
    # (loose tolerance accounts for bf16 MXU operands).
    ref = actor_forward_reference(state, params)
    np.testing.assert_allclose(np.asarray(out), np.asarray(ref), rtol=0.15, atol=3e-3)
    assert out.shape == (batch, action_size), out.shape
    assert bool(jnp.all(out >= 0.0))                    # final ReLU
    assert bool(jnp.all(jnp.isfinite(out)))

    # Exercise the cdiv grid with a partial tail tile (batch not a tile multiple).
    state2 = jax.random.normal(jax.random.PRNGKey(1), (20, 1, *state_size),
                               dtype=jnp.float32)
    out2 = jax.block_until_ready(fwd(state2, kp))
    ref2 = actor_forward_reference(state2, params)
    np.testing.assert_allclose(np.asarray(out2), np.asarray(ref2), rtol=0.15, atol=3e-3)
    assert out2.shape == (20, action_size)
    assert bool(jnp.all(jnp.isfinite(out2)))

    print("KERNEL_OK")
</pallas_src>

<mosaic_0001>
module attributes {stable_mosaic.version = 11 : i64} {
  func.func @kernel(%arg0: i32, %arg1: memref<2x256xf32, #tpu.memory_space<vmem>>, %arg2: memref<256x256xbf16, #tpu.memory_space<vmem>>, %arg3: memref<1x256xf32, #tpu.memory_space<vmem>>, %arg4: memref<256x256xbf16, #tpu.memory_space<vmem>>, %arg5: memref<1x256xf32, #tpu.memory_space<vmem>>, %arg6: memref<256x128xbf16, #tpu.memory_space<vmem>>, %arg7: memref<1x128xf32, #tpu.memory_space<vmem>>, %arg8: memref<128x6xbf16, #tpu.memory_space<vmem>>, %arg9: memref<1x6xf32, #tpu.memory_space<vmem>>, %arg10: memref<2x6xf32, #tpu.memory_space<vmem>>) attributes {dimension_semantics = [#tpu.dimension_semantics<parallel>], iteration_bounds = array<i64: 1>, scalar_prefetch = 0 : i64, scratch_operands = 0 : i64, tpu.core_type = #tpu.core_type<tc>, window_params = [{transform_indices = @transform_0, window_bounds = array<i64: 2, 256>}, {pipeline_mode = #tpu.pipeline_mode<synchronous>, transform_indices = @transform_1, window_bounds = array<i64: 256, 256>}, {pipeline_mode = #tpu.pipeline_mode<synchronous>, transform_indices = @transform_2, window_bounds = array<i64: 1, 256>}, {pipeline_mode = #tpu.pipeline_mode<synchronous>, transform_indices = @transform_3, window_bounds = array<i64: 256, 256>}, {pipeline_mode = #tpu.pipeline_mode<synchronous>, transform_indices = @transform_4, window_bounds = array<i64: 1, 256>}, {pipeline_mode = #tpu.pipeline_mode<synchronous>, transform_indices = @transform_5, window_bounds = array<i64: 256, 128>}, {pipeline_mode = #tpu.pipeline_mode<synchronous>, transform_indices = @transform_6, window_bounds = array<i64: 1, 128>}, {pipeline_mode = #tpu.pipeline_mode<synchronous>, transform_indices = @transform_7, window_bounds = array<i64: 128, 6>}, {pipeline_mode = #tpu.pipeline_mode<synchronous>, transform_indices = @transform_8, window_bounds = array<i64: 1, 6>}, {transform_indices = @transform_9, window_bounds = array<i64: 2, 6>}]} {
    %c0 = arith.constant 0 : index
    %c0_0 = arith.constant 0 : index
    %0 = vector.load %arg1[%c0, %c0_0] : memref<2x256xf32, #tpu.memory_space<vmem>>, vector<2x256xf32>
    %1 = arith.truncf %0 : vector<2x256xf32> to vector<2x256xbf16>
    %c0_1 = arith.constant 0 : index
    %c0_2 = arith.constant 0 : index
    %2 = vector.load %arg2[%c0_1, %c0_2] : memref<256x256xbf16, #tpu.memory_space<vmem>>, vector<256x256xbf16>
    %cst = arith.constant dense<0.000000e+00> : vector<2x256xf32>
    %3 = tpu.matmul %1, %2, %cst {dimension_numbers = #tpu.dot_dimension_numbers<[1], [0], [0], [1], [0, 0, 1, 1], [], []>} : vector<2x256xbf16>, vector<256x256xbf16>, vector<2x256xf32> -> vector<2x256xf32>
    %c0_3 = arith.constant 0 : index
    %c0_4 = arith.constant 0 : index
    %4 = vector.load %arg3[%c0_3, %c0_4] : memref<1x256xf32, #tpu.memory_space<vmem>>, vector<1x256xf32>
    %5 = vector.broadcast %4 : vector<1x256xf32> to vector<2x256xf32>
    %6 = arith.addf %3, %5 : vector<2x256xf32>
    %cst_5 = arith.constant 0.000000e+00 : f32
    %7 = vector.broadcast %cst_5 : f32 to vector<2x256xf32>
    %8 = arith.maximumf %6, %7 : vector<2x256xf32>
    %9 = arith.truncf %8 : vector<2x256xf32> to vector<2x256xbf16>
    %c0_6 = arith.constant 0 : index
    %c0_7 = arith.constant 0 : index
    %10 = vector.load %arg4[%c0_6, %c0_7] : memref<256x256xbf16, #tpu.memory_space<vmem>>, vector<256x256xbf16>
    %cst_8 = arith.constant dense<0.000000e+00> : vector<2x256xf32>
    %11 = tpu.matmul %9, %10, %cst_8 {dimension_numbers = #tpu.dot_dimension_numbers<[1], [0], [0], [1], [0, 0, 1, 1], [], []>} : vector<2x256xbf16>, vector<256x256xbf16>, vector<2x256xf32> -> vector<2x256xf32>
    %c0_9 = arith.constant 0 : index
    %c0_10 = arith.constant 0 : index
    %12 = vector.load %arg5[%c0_9, %c0_10] : memref<1x256xf32, #tpu.memory_space<vmem>>, vector<1x256xf32>
    %13 = vector.broadcast %12 : vector<1x256xf32> to vector<2x256xf32>
    %14 = arith.addf %11, %13 : vector<2x256xf32>
    %cst_11 = arith.constant 0.000000e+00 : f32
    %15 = vector.broadcast %cst_11 : f32 to vector<2x256xf32>
    %16 = arith.maximumf %14, %15 : vector<2x256xf32>
    %17 = arith.truncf %16 : vector<2x256xf32> to vector<2x256xbf16>
    %c0_12 = arith.constant 0 : index
    %c0_13 = arith.constant 0 : index
    %18 = vector.load %arg6[%c0_12, %c0_13] : memref<256x128xbf16, #tpu.memory_space<vmem>>, vector<256x128xbf16>
    %cst_14 = arith.constant dense<0.000000e+00> : vector<2x128xf32>
    %19 = tpu.matmul %17, %18, %cst_14 {dimension_numbers = #tpu.dot_dimension_numbers<[1], [0], [0], [1], [0, 0, 1, 1], [], []>} : vector<2x256xbf16>, vector<256x128xbf16>, vector<2x128xf32> -> vector<2x128xf32>
    %c0_15 = arith.constant 0 : index
    %c0_16 = arith.constant 0 : index
    %20 = vector.load %arg7[%c0_15, %c0_16] : memref<1x128xf32, #tpu.memory_space<vmem>>, vector<1x128xf32>
    %21 = vector.broadcast %20 : vector<1x128xf32> to vector<2x128xf32>
    %22 = arith.addf %19, %21 : vector<2x128xf32>
    %cst_17 = arith.constant 0.000000e+00 : f32
    %23 = vector.broadcast %cst_17 : f32 to vector<2x128xf32>
    %24 = arith.maximumf %22, %23 : vector<2x128xf32>
    %25 = arith.truncf %24 : vector<2x128xf32> to vector<2x128xbf16>
    %c0_18 = arith.constant 0 : index
    %c0_19 = arith.constant 0 : index
    %26 = vector.load %arg8[%c0_18, %c0_19] : memref<128x6xbf16, #tpu.memory_space<vmem>>, vector<128x6xbf16>
    %cst_20 = arith.constant dense<0.000000e+00> : vector<2x6xf32>
    %27 = tpu.matmul %25, %26, %cst_20 {dimension_numbers = #tpu.dot_dimension_numbers<[1], [0], [0], [1], [0, 0, 1, 1], [], []>} : vector<2x128xbf16>, vector<128x6xbf16>, vector<2x6xf32> -> vector<2x6xf32>
    %c0_21 = arith.constant 0 : index
    %c0_22 = arith.constant 0 : index
    %28 = vector.load %arg9[%c0_21, %c0_22] : memref<1x6xf32, #tpu.memory_space<vmem>>, vector<1x6xf32>
    %29 = vector.broadcast %28 : vector<1x6xf32> to vector<2x6xf32>
    %30 = arith.addf %27, %29 : vector<2x6xf32>
    %cst_23 = arith.constant 0.000000e+00 : f32
    %31 = vector.broadcast %cst_23 : f32 to vector<2x6xf32>
    %32 = arith.maximumf %30, %31 : vector<2x6xf32>
    %c0_24 = arith.constant 0 : index
    %c0_25 = arith.constant 0 : index
    %33 = vector.load %arg10[%c0_24, %c0_25] : memref<2x6xf32, #tpu.memory_space<vmem>>, vector<2x6xf32>
    tpu.vector_store %arg10[%c0_24, %c0_25], %32 {strides = array<i32>} : memref<2x6xf32, #tpu.memory_space<vmem>>, vector<2x6xf32>,
    return
  }
  func.func @transform_0(%arg0: i32) -> (i32, i32) {
    %c0_i32 = arith.constant 0 : i32
    %c0_i32_0 = arith.constant 0 : i32
    return %arg0, %c0_i32 : i32, i32
  }
  func.func @transform_1(%arg0: i32) -> (i32, i32) {
    %c0_i32 = arith.constant 0 : i32
    %c0_i32_0 = arith.constant 0 : i32
    %c0_i32_1 = arith.constant 0 : i32
    return %c0_i32, %c0_i32_0 : i32, i32
  }
  func.func @transform_2(%arg0: i32) -> (i32, i32) {
    %c0_i32 = arith.constant 0 : i32
    %c0_i32_0 = arith.constant 0 : i32
    %c0_i32_1 = arith.constant 0 : i32
    return %c0_i32, %c0_i32_0 : i32, i32
  }
  func.func @transform_3(%arg0: i32) -> (i32, i32) {
    %c0_i32 = arith.constant 0 : i32
    %c0_i32_0 = arith.constant 0 : i32
    %c0_i32_1 = arith.constant 0 : i32
    return %c0_i32, %c0_i32_0 : i32, i32
  }
  func.func @transform_4(%arg0: i32) -> (i32, i32) {
    %c0_i32 = arith.constant 0 : i32
    %c0_i32_0 = arith.constant 0 : i32
    %c0_i32_1 = arith.constant 0 : i32
    return %c0_i32, %c0_i32_0 : i32, i32
  }
  func.func @transform_5(%arg0: i32) -> (i32, i32) {
    %c0_i32 = arith.constant 0 : i32
    %c0_i32_0 = arith.constant 0 : i32
    %c0_i32_1 = arith.constant 0 : i32
    return %c0_i32, %c0_i32_0 : i32, i32
  }
  func.func @transform_6(%arg0: i32) -> (i32, i32) {
    %c0_i32 = arith.constant 0 : i32
    %c0_i32_0 = arith.constant 0 : i32
    %c0_i32_1 = arith.constant 0 : i32
    return %c0_i32, %c0_i32_0 : i32, i32
  }
  func.func @transform_7(%arg0: i32) -> (i32, i32) {
    %c0_i32 = arith.constant 0 : i32
    %c0_i32_0 = arith.constant 0 : i32
    %c0_i32_1 = arith.constant 0 : i32
    return %c0_i32, %c0_i32_0 : i32, i32
  }
  func.func @transform_8(%arg0: i32) -> (i32, i32) {
    %c0_i32 = arith.constant 0 : i32
    %c0_i32_0 = arith.constant 0 : i32
    %c0_i32_1 = arith.constant 0 : i32
    return %c0_i32, %c0_i32_0 : i32, i32
  }
  func.func @transform_9(%arg0: i32) -> (i32, i32) {
    %c0_i32 = arith.constant 0 : i32
    %c0_i32_0 = arith.constant 0 : i32
    return %arg0, %c0_i32 : i32, i32
  }
}

</mosaic_0001>

<llo_original>
// kernel: actor_forward.1
$region0: #{actor_forward.1}
  #allocation0 [shape = 'u32[]', space=smem, size = 0x4, offset = 0x4, fixed_abs, tag = 'smem constant byte address 0x4 - core index']
  #allocation1 [shape = 'u32[144,128]{1,0:T(1,128)}', space=vmem, size = 0x12000, scoped, tag = 'internal scratch']
  %s0 = inlined_call_operand.vmem [shape: f32[2,256], index: 0, kind: input, shape index: {}]
  %s1 = inlined_call_operand.hbm [shape: bf16[256,256], index: 1, kind: input, shape index: {}]
  %s2 = inlined_call_operand.vmem [shape: f32[1,256], index: 2, kind: input, shape index: {}]
  %s3 = inlined_call_operand.hbm [shape: bf16[256,256], index: 3, kind: input, shape index: {}]
  %s4 = inlined_call_operand.hbm [shape: f32[1,256], index: 4, kind: input, shape index: {}]
  %s5 = inlined_call_operand.vmem [shape: bf16[256,128], index: 5, kind: input, shape index: {}]
  %s6 = inlined_call_operand.hbm [shape: f32[1,128], index: 6, kind: input, shape index: {}]
  %s7 = inlined_call_operand.vmem [shape: bf16[128,6], index: 7, kind: input, shape index: {}]
  %s8 = inlined_call_operand.hbm [shape: f32[1,6], index: 8, kind: input, shape index: {}]
  %s9 = inlined_call_operand.hbm [shape: f32[2,6], index: 9, kind: output, shape index: {}]
  %s10 = sld [smem:[#allocation0]]
  $region66: #{actor_forward.1} parent=0
    _
  %s12 = ssub.s32 1, %s10
  %s13 = scalar_select 0, %s12, %s10
  $region1: #{actor_forward.1} parent=0
    #allocation2 [shape = 'u8[131072]{0}', space=vmem, size = 0x20000, scoped, tag = 'input window, operand 1, single buffered']
    #allocation3 [shape = 's32[1]{0}', space=sflag, size = 0x4, scoped, tag = 'scoped memory for actor_forward.1']
    #allocation4 [shape = 's32[1]{0}', space=sflag, size = 0x4, scoped, tag = 'scoped memory for actor_forward.1']
    #allocation5 [shape = 'u8[131072]{0}', space=vmem, size = 0x20000, scoped, tag = 'input window, operand 3, single buffered']
    #allocation6 [shape = 's32[1]{0}', space=sflag, size = 0x4, scoped, tag = 'scoped memory for actor_forward.1']
    #allocation7 [shape = 'u8[1024]{0}', space=vmem, size = 0x400, scoped, tag = 'input window, operand 4, single buffered']
    #allocation8 [shape = 'u8[512]{0}', space=vmem, size = 0x400, scoped, tag = 'input window, operand 6, single buffered']
    #allocation9 [shape = 's32[1]{0}', space=sflag, size = 0x4, scoped, tag = 'scoped memory for actor_forward.1']
    #allocation10 [shape = 'u8[512]{0}', space=vmem, size = 0x400, scoped, tag = 'input window, operand 8, single buffered']
    #allocation11 [shape = 'u8[1024]{0}', space=vmem, size = 0x400, scoped, tag = 'output window, operand 0, single buffered']
    %14 = vsyncpa [#allocation3], 0
    %15 = vsyncpa [#allocation6], 0
    %16 = vsyncpa [#allocation9], 0
    %17 = vsyncpa [#allocation4], 0
    // Predicated region
    $region2: #{actor_forward.1} parent=1 // pred_check
      _
    $region3: #{actor_forward.1} parent=1 // pred_check_branch
      %19 = sbr.rel (0) target = $region5
    $region4: #{actor_forward.1} parent=1 // pred_region
      _
    $region5: #{actor_forward.1} parent=1 // pred_fallthru
      _
    // Predicated region
    $region6: #{actor_forward.1} parent=1 // pred_check
      _
    $region7: #{actor_forward.1} parent=1 // pred_check_branch
      %21 = sbr.rel (0) target = $region9
    $region8: #{actor_forward.1} parent=1 // pred_region
      %s23 = ssub.s32 4096, 4096
      %24 = vsyncadd [#allocation3], %s23
      %s25 = sshll.u32 [#allocation2], 4
      %s26 = int_to_ptr.vmem [resolvable:$true] %s25
      %31 = dma.hbm_to_vmem [thread:$0]  %s1, 4096, %s26, [#allocation3], 128, 128, 8
    $region9: #{actor_forward.1} parent=1 // pred_fallthru
      _
    // Predicated region
    $region10: #{actor_forward.1} parent=1 // pred_check
      _
    $region11: #{actor_forward.1} parent=1 // pred_check_branch
      %33 = sbr.rel (0) target = $region13
    $region12: #{actor_forward.1} parent=1 // pred_region
      _
    $region13: #{actor_forward.1} parent=1 // pred_fallthru
      _
    // Predicated region
    $region14: #{actor_forward.1} parent=1 // pred_check
      _
    $region15: #{actor_forward.1} parent=1 // pred_check_branch
      %35 = sbr.rel (0) target = $region17
    $region16: #{actor_forward.1} parent=1 // pred_region
      %s37 = ssub.s32 4096, 4096
      %38 = vsyncadd [#allocation6], %s37
      %s39 = sshll.u32 [#allocation5], 4
      %s40 = int_to_ptr.vmem [resolvable:$true] %s39
      %45 = dma.hbm_to_vmem [thread:$0]  %s3, 4096, %s40, [#allocation6], 128, 128, 8
    $region17: #{actor_forward.1} parent=1 // pred_fallthru
      _
    // Predicated region
    $region18: #{actor_forward.1} parent=1 // pred_check
      _
    $region19: #{actor_forward.1} parent=1 // pred_check_branch
      %47 = sbr.rel (0) target = $region21
    $region20: #{actor_forward.1} parent=1 // pred_region
      %s49 = ssub.s32 32, 32
      %50 = vsyncadd [#allocation6], %s49
      %s52 = sshll.u32 [#allocation7], 4
      %s53 = int_to_ptr.vmem [resolvable:$true] %s52
      %55 = dma.hbm_to_vmem [thread:$0]  %s4, 32, %s53, [#allocation6]
    $region21: #{actor_forward.1} parent=1 // pred_fallthru
      _
    // Predicated region
    $region22: #{actor_forward.1} parent=1 // pred_check
      _
    $region23: #{actor_forward.1} parent=1 // pred_check_branch
      %57 = sbr.rel (0) target = $region25
    $region24: #{actor_forward.1} parent=1 // pred_region
      _
    $region25: #{actor_forward.1} parent=1 // pred_fallthru
      _
    // Predicated region
    $region26: #{actor_forward.1} parent=1 // pred_check
      _
    $region27: #{actor_forward.1} parent=1 // pred_check_branch
      %59 = sbr.rel (0) target = $region29
    $region28: #{actor_forward.1} parent=1 // pred_region
      %s61 = ssub.s32 16, 16
      %62 = vsyncadd [#allocation9], %s61
      %s64 = sshll.u32 [#allocation8], 4
      %s65 = int_to_ptr.vmem [resolvable:$true] %s64
      %67 = dma.hbm_to_vmem [thread:$0]  %s6, 16, %s65, [#allocation9]
    $region29: #{actor_forward.1} parent=1 // pred_fallthru
      _
    // Predicated region
    $region30: #{actor_forward.1} parent=1 // pred_check
      _
    $region31: #{actor_forward.1} parent=1 // pred_check_branch
      %69 = sbr.rel (0) target = $region33
    $region32: #{actor_forward.1} parent=1 // pred_region
      _
    $region33: #{actor_forward.1} parent=1 // pred_fallthru
      _
    // Predicated region
    $region34: #{actor_forward.1} parent=1 // pred_check
      _
    $region35: #{actor_forward.1} parent=1 // pred_check_branch
      %71 = sbr.rel (0) target = $region37
    $region36: #{actor_forward.1} parent=1 // pred_region
      %s73 = ssub.s32 16, 16
      %74 = vsyncadd [#allocation9], %s73
      %s76 = sshll.u32 [#allocation10], 4
      %s77 = int_to_ptr.vmem [resolvable:$true] %s76
      %79 = dma.hbm_to_vmem [thread:$0]  %s8, 16, %s77, [#allocation9]
    $region37: #{actor_forward.1} parent=1 // pred_fallthru
      _
    // Predicated region
    $region38: #{actor_forward.1} parent=1 // pred_check
      _
    $region39: #{actor_forward.1} parent=1 // pred_check_branch
      %81 = sbr.rel (0) target = $region41
    $region40: #{actor_forward.1} parent=1 // pred_region
      %82 = dma.done [#allocation3], 4096
    $region41: #{actor_forward.1} parent=1 // pred_fallthru
      _
    // Predicated region
    $region42: #{actor_forward.1} parent=1 // pred_check
      _
    $region43: #{actor_forward.1} parent=1 // pred_check_branch
      %84 = sbr.rel (0) target = $region45
    $region44: #{actor_forward.1} parent=1 // pred_region
      %85 = dma.done [#allocation6], 4096
    $region45: #{actor_forward.1} parent=1 // pred_fallthru
      _
    // Predicated region
    $region46: #{actor_forward.1} parent=1 // pred_check
      _
    $region47: #{actor_forward.1} parent=1 // pred_check_branch
      %87 = sbr.rel (0) target = $region49
    $region48: #{actor_forward.1} parent=1 // pred_region
      %88 = dma.done [#allocation6], 32
    $region49: #{actor_forward.1} parent=1 // pred_fallthru
      _
    // Predicated region
    $region50: #{actor_forward.1} parent=1 // pred_check
      _
    $region51: #{actor_forward.1} parent=1 // pred_check_branch
      %90 = sbr.rel (0) target = $region53
    $region52: #{actor_forward.1} parent=1 // pred_region
      %91 = dma.done [#allocation9], 16
    $region53: #{actor_forward.1} parent=1 // pred_fallthru
      _
    // Predicated region
    $region54: #{actor_forward.1} parent=1 // pred_check
      _
    $region55: #{actor_forward.1} parent=1 // pred_check_branch
      %93 = sbr.rel (0) target = $region57
    $region56: #{actor_forward.1} parent=1 // pred_region
      %94 = dma.done [#allocation9], 16
    $region57: #{actor_forward.1} parent=1 // pred_fallthru
      _
    %v96 = vld [vmem:[%s0] sm:$0xf]
    %v99 = vunpack.c.l.s4 1983009808
    %v100 = vunpack.c.0.s8 %v99
    %v101 = vlaneseq
    %v102 = vshrl.u32 %v101, 7
    %v103 = vsub.s32 %v100, %v102
    %v104 = vrot.slane %v96, %v103
    %v105 = vcombine.high %v104, %v104
    %v108 = vpack.c.bf16 %v104, %v104
    %v109 = vpack.c.bf16 %v105, %v105
    %v110 = vld [vmem:[#allocation2] sm:$0xff]
    %v111 = vld [vmem:[#allocation2 + $0x8] sm:$0xff]
    %v112 = vld [vmem:[#allocation2 + $0x10] sm:$0xff]
    %v113 = vld [vmem:[#allocation2 + $0x18] sm:$0xff]
    %v114 = vld [vmem:[#allocation2 + $0x20] sm:$0xff]
    %v115 = vld [vmem:[#allocation2 + $0x28] sm:$0xff]
    %v116 = vld [vmem:[#allocation2 + $0x30] sm:$0xff]
    %v117 = vld [vmem:[#allocation2 + $0x38] sm:$0xff]
    %v118 = vld [vmem:[#allocation2 + $0x40] sm:$0xff]
    %v119 = vld [vmem:[#allocation2 + $0x48] sm:$0xff]
    %v120 = vld [vmem:[#allocation2 + $0x50] sm:$0xff]
    %v121 = vld [vmem:[#allocation2 + $0x58] sm:$0xff]
    %v122 = vld [vmem:[#allocation2 + $0x60] sm:$0xff]
    %v123 = vld [vmem:[#allocation2 + $0x68] sm:$0xff]
    %v124 = vld [vmem:[#allocation2 + $0x70] sm:$0xff]
    %v125 = vld [vmem:[#allocation2 + $0x78] sm:$0xff]
    %v126 = vld [vmem:[#allocation2 + $0x80] sm:$0xff]
    %v127 = vld [vmem:[#allocation2 + $0x88] sm:$0xff]
    %v128 = vld [vmem:[#allocation2 + $0x90] sm:$0xff]
    %v129 = vld [vmem:[#allocation2 + $0x98] sm:$0xff]
    %v130 = vld [vmem:[#allocation2 + $0xa0] sm:$0xff]
    %v131 = vld [vmem:[#allocation2 + $0xa8] sm:$0xff]
    %v132 = vld [vmem:[#allocation2 + $0xb0] sm:$0xff]
    %v133 = vld [vmem:[#allocation2 + $0xb8] sm:$0xff]
    %v134 = vld [vmem:[#allocation2 + $0xc0] sm:$0xff]
    %v135 = vld [vmem:[#allocation2 + $0xc8] sm:$0xff]
    %v136 = vld [vmem:[#allocation2 + $0xd0] sm:$0xff]
    %v137 = vld [vmem:[#allocation2 + $0xd8] sm:$0xff]
    %v138 = vld [vmem:[#allocation2 + $0xe0] sm:$0xff]
    %v139 = vld [vmem:[#allocation2 + $0xe8] sm:$0xff]
    %v140 = vld [vmem:[#allocation2 + $0xf0] sm:$0xff]
    %v141 = vld [vmem:[#allocation2 + $0xf8] sm:$0xff]
    %v142 = vld [vmem:[%s2] sm:$0x3]
    %v144 = vlaneseq
    %v145 = vshrl.u32 %v144, 7
    %v146 = vsub.s32 0, %v145
    %v147 = vrot.slane %v142, %v146
    %v148 = vlaneseq
    %v149 = vshrl.u32 %v148, 7
    %v150 = vsub.s32 1, %v149
    %v151 = vrot.slane %v142, %v150
    %v186 = vunpack.c.l.b16 %v110
    %v187 = vunpack.c.h.b16 %v110
    %v188 = vunpack.c.l.b16 %v111
    %v189 = vunpack.c.h.b16 %v111
    %v190 = vunpack.c.l.b16 %v112
    %v191 = vunpack.c.h.b16 %v112
    %v192 = vunpack.c.l.b16 %v113
    %v193 = vunpack.c.h.b16 %v113
    %v194 = vunpack.c.l.b16 %v114
    %v195 = vunpack.c.h.b16 %v114
    %v196 = vunpack.c.l.b16 %v115
    %v197 = vunpack.c.h.b16 %v115
    %v198 = vunpack.c.l.b16 %v116
    %v199 = vunpack.c.h.b16 %v116
    %v200 = vunpack.c.l.b16 %v117
    %v201 = vunpack.c.h.b16 %v117
    %v202 = vunpack.c.l.b16 %v118
    %v203 = vunpack.c.h.b16 %v118
    %v204 = vunpack.c.l.b16 %v119
    %v205 = vunpack.c.h.b16 %v119
    %v206 = vunpack.c.l.b16 %v120
    %v207 = vunpack.c.h.b16 %v120
    %v208 = vunpack.c.l.b16 %v121
    %v209 = vunpack.c.h.b16 %v121
    %v210 = vunpack.c.l.b16 %v122
    %v211 = vunpack.c.h.b16 %v122
    %v212 = vunpack.c.l.b16 %v123
    %v213 = vunpack.c.h.b16 %v123
    %v214 = vunpack.c.l.b16 %v124
    %v215 = vunpack.c.h.b16 %v124
    %v216 = vunpack.c.l.b16 %v125
    %v217 = vunpack.c.h.b16 %v125
    %v218 = vunpack.c.l.b16 %v126
    %v219 = vunpack.c.h.b16 %v126
    %v220 = vunpack.c.l.b16 %v127
    %v221 = vunpack.c.h.b16 %v127
    %v222 = vunpack.c.l.b16 %v128
    %v223 = vunpack.c.h.b16 %v128
    %v224 = vunpack.c.l.b16 %v129
    %v225 = vunpack.c.h.b16 %v129
    %v226 = vunpack.c.l.b16 %v130
    %v227 = vunpack.c.h.b16 %v130
    %v228 = vunpack.c.l.b16 %v131
    %v229 = vunpack.c.h.b16 %v131
    %v230 = vunpack.c.l.b16 %v132
    %v231 = vunpack.c.h.b16 %v132
    %v232 = vunpack.c.l.b16 %v133
    %v233 = vunpack.c.h.b16 %v133
    %v234 = vunpack.c.l.b16 %v134
    %v235 = vunpack.c.h.b16 %v134
    %v236 = vunpack.c.l.b16 %v135
    %v237 = vunpack.c.h.b16 %v135
    %v238 = vunpack.c.l.b16 %v136
    %v239 = vunpack.c.h.b16 %v136
    %v240 = vunpack.c.l.b16 %v137
    %v241 = vunpack.c.h.b16 %v137
    %v242 = vunpack.c.l.b16 %v138
    %v243 = vunpack.c.h.b16 %v138
    %v244 = vunpack.c.l.b16 %v139
    %v245 = vunpack.c.h.b16 %v139
    %v246 = vunpack.c.l.b16 %v140
    %v247 = vunpack.c.h.b16 %v140
    %v248 = vunpack.c.l.b16 %v141
    %v249 = vunpack.c.h.b16 %v141
    %v250 = vpack.c.b16 %v188, %v186
    %v251 = vpack.c.b16 %v189, %v187
    %v252 = vpack.c.b16 %v192, %v190
    %v253 = vpack.c.b16 %v193, %v191
    %v254 = vpack.c.b16 %v196, %v194
    %v255 = vpack.c.b16 %v197, %v195
    %v256 = vpack.c.b16 %v200, %v198
    %v257 = vpack.c.b16 %v201, %v199
    %v258 = vpack.c.b16 %v204, %v202
    %v259 = vpack.c.b16 %v205, %v203
    %v260 = vpack.c.b16 %v208, %v206
    %v261 = vpack.c.b16 %v209, %v207
    %v262 = vpack.c.b16 %v212, %v210
    %v263 = vpack.c.b16 %v213, %v211
    %v264 = vpack.c.b16 %v216, %v214
    %v265 = vpack.c.b16 %v217, %v215
    %v266 = vpack.c.b16 %v220, %v218
    %v267 = vpack.c.b16 %v221, %v219
    %v268 = vpack.c.b16 %v224, %v222
    %v269 = vpack.c.b16 %v225, %v223
    %v270 = vpack.c.b16 %v228, %v226
    %v271 = vpack.c.b16 %v229, %v227
    %v272 = vpack.c.b16 %v232, %v230
    %v273 = vpack.c.b16 %v233, %v231
    %v274 = vpack.c.b16 %v236, %v234
    %v275 = vpack.c.b16 %v237, %v235
    %v276 = vpack.c.b16 %v240, %v238
    %v277 = vpack.c.b16 %v241, %v239
    %v278 = vpack.c.b16 %v244, %v242
    %v279 = vpack.c.b16 %v245, %v243
    %v280 = vpack.c.b16 %v248, %v246
    %v281 = vpack.c.b16 %v249, %v247
    %314 = vmatprep.subr.bf16.mxu0 %v251
    %315 = vmatpush1.bf16.msra.mxu0 %v250
    %316 = vmatprep.subr.bf16.mxu0 %v253
    %317 = vmatpush1.bf16.msra.mxu0 %v252
    %318 = vmatprep.subr.bf16.mxu0 %v255
    %319 = vmatpush1.bf16.msra.mxu0 %v254
    %320 = vmatprep.subr.bf16.mxu0 %v257
    %321 = vmatpush1.bf16.msra.mxu0 %v256
    %322 = vmatprep.subr.bf16.mxu0 %v259
    %323 = vmatpush1.bf16.msra.mxu0 %v258
    %324 = vmatprep.subr.bf16.mxu0 %v261
    %325 = vmatpush1.bf16.msra.mxu0 %v260
    %326 = vmatprep.subr.bf16.mxu0 %v263
    %327 = vmatpush1.bf16.msra.mxu0 %v262
    %328 = vmatprep.subr.bf16.mxu0 %v265
    %329 = vmatpush1.bf16.msra.mxu0 %v264
    %330 = vmatprep.subr.bf16.mxu0 %v267
    %331 = vmatpush1.bf16.msra.mxu0 %v266
    %332 = vmatprep.subr.bf16.mxu0 %v269
    %333 = vmatpush1.bf16.msra.mxu0 %v268
    %334 = vmatprep.subr.bf16.mxu0 %v271
    %335 = vmatpush1.bf16.msra.mxu0 %v270
    %336 = vmatprep.subr.bf16.mxu0 %v273
    %337 = vmatpush1.bf16.msra.mxu0 %v272
    %338 = vmatprep.subr.bf16.mxu0 %v275
    %339 = vmatpush1.bf16.msra.mxu0 %v274
    %340 = vmatprep.subr.bf16.mxu0 %v277
    %341 = vmatpush1.bf16.msra.mxu0 %v276
    %342 = vmatprep.subr.bf16.mxu0 %v279
    %343 = vmatpush1.bf16.msra.mxu0 %v278
    %344 = vmatprep.subr.bf16.mxu0 %v281
    %345 = vmatpush1.bf16.msra.mxu0 %v280
    %346 = vmatprep.mubr.bf16.mxu0 %v109
    %347 = vmatmul.mubr.bf16.gmra.mrb[0].mxu0 %v108
    %v348 = vpop.f32.mrb[0].mxu0
    %v349 = vadd.f32 %v147, %v348
    %v350 = vpop.f32.mrb[0].mxu0
    %v351 = vadd.f32 %v151, %v350
    %v352 = vpop.f32.mrb[0].mxu0
    %v353 = vpop.f32.mrb[0].mxu0
    %354 = vdwg.mxu0
    %v355 = vmax.f32 %v349, 0.0
    %v356 = vmax.f32 %v351, 0.0
    %v357 = vpack.c.bf16 %v355, %v355
    %v358 = vpack.c.bf16 %v356, %v356
    %v359 = vld [vmem:[#allocation5] sm:$0xff]
    %v360 = vld [vmem:[#allocation5 + $0x8] sm:$0xff]
    %v361 = vld [vmem:[#allocation5 + $0x10] sm:$0xff]
    %v362 = vld [vmem:[#allocation5 + $0x18] sm:$0xff]
    %v363 = vld [vmem:[#allocation5 + $0x20] sm:$0xff]
    %v364 = vld [vmem:[#allocation5 + $0x28] sm:$0xff]
    %v365 = vld [vmem:[#allocation5 + $0x30] sm:$0xff]
    %v366 = vld [vmem:[#allocation5 + $0x38] sm:$0xff]
    %v367 = vld [vmem:[#allocation5 + $0x40] sm:$0xff]
    %v368 = vld [vmem:[#allocation5 + $0x48] sm:$0xff]
    %v369 = vld [vmem:[#allocation5 + $0x50] sm:$0xff]
    %v370 = vld [vmem:[#allocation5 + $0x58] sm:$0xff]
    %v371 = vld [vmem:[#allocation5 + $0x60] sm:$0xff]
    %v372 = vld [vmem:[#allocation5 + $0x68] sm:$0xff]
    %v373 = vld [vmem:[#allocation5 + $0x70] sm:$0xff]
    %v374 = vld [vmem:[#allocation5 + $0x78] sm:$0xff]
    %v375 = vld [vmem:[#allocation5 + $0x80] sm:$0xff]
    %v376 = vld [vmem:[#allocation5 + $0x88] sm:$0xff]
    %v377 = vld [vmem:[#allocation5 + $0x90] sm:$0xff]
    %v378 = vld [vmem:[#allocation5 + $0x98] sm:$0xff]
    %v379 = vld [vmem:[#allocation5 + $0xa0] sm:$0xff]
    %v380 = vld [vmem:[#allocation5 + $0xa8] sm:$0xff]
    %v381 = vld [vmem:[#allocation5 + $0xb0] sm:$0xff]
    %v382 = vld [vmem:[#allocation5 + $0xb8] sm:$0xff]
    %v383 = vld [vmem:[#allocation5 + $0xc0] sm:$0xff]
    %v384 = vld [vmem:[#allocation5 + $0xc8] sm:$0xff]
    %v385 = vld [vmem:[#allocation5 + $0xd0] sm:$0xff]
    %v386 = vld [vmem:[#allocation5 + $0xd8] sm:$0xff]
    %v387 = vld [vmem:[#allocation5 + $0xe0] sm:$0xff]
    %v388 = vld [vmem:[#allocation5 + $0xe8] sm:$0xff]
    %v389 = vld [vmem:[#allocation5 + $0xf0] sm:$0xff]
    %v390 = vld [vmem:[#allocation5 + $0xf8] sm:$0xff]
    %v391 = vld [vmem:[#allocation7] sm:$0x3]
    %v393 = vlaneseq
    %v394 = vshrl.u32 %v393, 7
    %v395 = vsub.s32 0, %v394
    %v396 = vrot.slane %v391, %v395
    %v397 = vlaneseq
    %v398 = vshrl.u32 %v397, 7
    %v399 = vsub.s32 1, %v398
    %v400 = vrot.slane %v391, %v399
    %v435 = vunpack.c.l.b16 %v359
    %v436 = vunpack.c.h.b16 %v359
    %v437 = vunpack.c.l.b16 %v360
    %v438 = vunpack.c.h.b16 %v360
    %v439 = vunpack.c.l.b16 %v361
    %v440 = vunpack.c.h.b16 %v361
    %v441 = vunpack.c.l.b16 %v362
    %v442 = vunpack.c.h.b16 %v362
    %v443 = vunpack.c.l.b16 %v363
    %v444 = vunpack.c.h.b16 %v363
    %v445 = vunpack.c.l.b16 %v364
    %v446 = vunpack.c.h.b16 %v364
    %v447 = vunpack.c.l.b16 %v365
    %v448 = vunpack.c.h.b16 %v365
    %v449 = vunpack.c.l.b16 %v366
    %v450 = vunpack.c.h.b16 %v366
    %v451 = vunpack.c.l.b16 %v367
    %v452 = vunpack.c.h.b16 %v367
    %v453 = vunpack.c.l.b16 %v368
    %v454 = vunpack.c.h.b16 %v368
    %v455 = vunpack.c.l.b16 %v369
    %v456 = vunpack.c.h.b16 %v369
    %v457 = vunpack.c.l.b16 %v370
    %v458 = vunpack.c.h.b16 %v370
    %v459 = vunpack.c.l.b16 %v371
    %v460 = vunpack.c.h.b16 %v371
    %v461 = vunpack.c.l.b16 %v372
    %v462 = vunpack.c.h.b16 %v372
    %v463 = vunpack.c.l.b16 %v373
    %v464 = vunpack.c.h.b16 %v373
    %v465 = vunpack.c.l.b16 %v374
    %v466 = vunpack.c.h.b16 %v374
    %v467 = vunpack.c.l.b16 %v375
    %v468 = vunpack.c.h.b16 %v375
    %v469 = vunpack.c.l.b16 %v376
    %v470 = vunpack.c.h.b16 %v376
    %v471 = vunpack.c.l.b16 %v377
    %v472 = vunpack.c.h.b16 %v377
    %v473 = vunpack.c.l.b16 %v378
    %v474 = vunpack.c.h.b16 %v378
    %v475 = vunpack.c.l.b16 %v379
    %v476 = vunpack.c.h.b16 %v379
    %v477 = vunpack.c.l.b16 %v380
    %v478 = vunpack.c.h.b16 %v380
    %v479 = vunpack.c.l.b16 %v381
    %v480 = vunpack.c.h.b16 %v381
    %v481 = vunpack.c.l.b16 %v382
    %v482 = vunpack.c.h.b16 %v382
    %v483 = vunpack.c.l.b16 %v383
    %v484 = vunpack.c.h.b16 %v383
    %v485 = vunpack.c.l.b16 %v384
    %v486 = vunpack.c.h.b16 %v384
    %v487 = vunpack.c.l.b16 %v385
    %v488 = vunpack.c.h.b16 %v385
    %v489 = vunpack.c.l.b16 %v386
    %v490 = vunpack.c.h.b16 %v386
    %v491 = vunpack.c.l.b16 %v387
    %v492 = vunpack.c.h.b16 %v387
    %v493 = vunpack.c.l.b16 %v388
    %v494 = vunpack.c.h.b16 %v388
    %v495 = vunpack.c.l.b16 %v389
    %v496 = vunpack.c.h.b16 %v389
    %v497 = vunpack.c.l.b16 %v390
    %v498 = vunpack.c.h.b16 %v390
    %v499 = vpack.c.b16 %v437, %v435
    %v500 = vpack.c.b16 %v438, %v436
    %v501 = vpack.c.b16 %v441, %v439
    %v502 = vpack.c.b16 %v442, %v440
    %v503 = vpack.c.b16 %v445, %v443
    %v504 = vpack.c.b16 %v446, %v444
    %v505 = vpack.c.b16 %v449, %v447
    %v506 = vpack.c.b16 %v450, %v448
    %v507 = vpack.c.b16 %v453, %v451
    %v508 = vpack.c.b16 %v454, %v452
    %v509 = vpack.c.b16 %v457, %v455
    %v510 = vpack.c.b16 %v458, %v456
    %v511 = vpack.c.b16 %v461, %v459
    %v512 = vpack.c.b16 %v462, %v460
    %v513 = vpack.c.b16 %v465, %v463
    %v514 = vpack.c.b16 %v466, %v464
    %v515 = vpack.c.b16 %v469, %v467
    %v516 = vpack.c.b16 %v470, %v468
    %v517 = vpack.c.b16 %v473, %v471
    %v518 = vpack.c.b16 %v474, %v472
    %v519 = vpack.c.b16 %v477, %v475
    %v520 = vpack.c.b16 %v478, %v476
    %v521 = vpack.c.b16 %v481, %v479
    %v522 = vpack.c.b16 %v482, %v480
    %v523 = vpack.c.b16 %v485, %v483
    %v524 = vpack.c.b16 %v486, %v484
    %v525 = vpack.c.b16 %v489, %v487
    %v526 = vpack.c.b16 %v490, %v488
    %v527 = vpack.c.b16 %v493, %v491
    %v528 = vpack.c.b16 %v494, %v492
    %v529 = vpack.c.b16 %v497, %v495
    %v530 = vpack.c.b16 %v498, %v496
    %563 = vmatprep.subr.bf16.mxu0 %v500
    %564 = vmatpush1.bf16.msra.mxu0 %v499
    %565 = vmatprep.subr.bf16.mxu0 %v502
    %566 = vmatpush1.bf16.msra.mxu0 %v501
    %567 = vmatprep.subr.bf16.mxu0 %v504
    %568 = vmatpush1.bf16.msra.mxu0 %v503
    %569 = vmatprep.subr.bf16.mxu0 %v506
    %570 = vmatpush1.bf16.msra.mxu0 %v505
    %571 = vmatprep.subr.bf16.mxu0 %v508
    %572 = vmatpush1.bf16.msra.mxu0 %v507
    %573 = vmatprep.subr.bf16.mxu0 %v510
    %574 = vmatpush1.bf16.msra.mxu0 %v509
    %575 = vmatprep.subr.bf16.mxu0 %v512
    %576 = vmatpush1.bf16.msra.mxu0 %v511
    %577 = vmatprep.subr.bf16.mxu0 %v514
    %578 = vmatpush1.bf16.msra.mxu0 %v513
    %579 = vmatprep.subr.bf16.mxu0 %v516
    %580 = vmatpush1.bf16.msra.mxu0 %v515
    %581 = vmatprep.subr.bf16.mxu0 %v518
    %582 = vmatpush1.bf16.msra.mxu0 %v517
    %583 = vmatprep.subr.bf16.mxu0 %v520
    %584 = vmatpush1.bf16.msra.mxu0 %v519
    %585 = vmatprep.subr.bf16.mxu0 %v522
    %586 = vmatpush1.bf16.msra.mxu0 %v521
    %587 = vmatprep.subr.bf16.mxu0 %v524
    %588 = vmatpush1.bf16.msra.mxu0 %v523
    %589 = vmatprep.subr.bf16.mxu0 %v526
    %590 = vmatpush1.bf16.msra.mxu0 %v525
    %591 = vmatprep.subr.bf16.mxu0 %v528
    %592 = vmatpush1.bf16.msra.mxu0 %v527
    %593 = vmatprep.subr.bf16.mxu0 %v530
    %594 = vmatpush1.bf16.msra.mxu0 %v529
    %595 = vmatprep.mubr.bf16.mxu0 %v358
    %596 = vmatmul.mubr.bf16.gmra.mrb[0].mxu0 %v357
    %v597 = vpop.f32.mrb[0].mxu0
    %v598 = vadd.f32 %v396, %v597
    %v599 = vpop.f32.mrb[0].mxu0
    %v600 = vadd.f32 %v400, %v599
    %v601 = vpop.f32.mrb[0].mxu0
    %v602 = vpop.f32.mrb[0].mxu0
    %603 = vdwg.mxu0
    %v604 = vmax.f32 %v598, 0.0
    %v605 = vmax.f32 %v600, 0.0
    %v606 = vpack.c.bf16 %v604, %v604
    %v607 = vpack.c.bf16 %v605, %v605
    %v608 = vld [vmem:[%s5] sm:$0xf]
    %v609 = vld [vmem:[%s5 + $0x4] sm:$0xf]
    %v610 = vld [vmem:[%s5 + $0x8] sm:$0xf]
    %v611 = vld [vmem:[%s5 + $0xc] sm:$0xf]
    %v612 = vld [vmem:[%s5 + $0x10] sm:$0xf]
    %v613 = vld [vmem:[%s5 + $0x14] sm:$0xf]
    %v614 = vld [vmem:[%s5 + $0x18] sm:$0xf]
    %v615 = vld [vmem:[%s5 + $0x1c] sm:$0xf]
    %v616 = vld [vmem:[%s5 + $0x20] sm:$0xf]
    %v617 = vld [vmem:[%s5 + $0x24] sm:$0xf]
    %v618 = vld [vmem:[%s5 + $0x28] sm:$0xf]
    %v619 = vld [vmem:[%s5 + $0x2c] sm:$0xf]
    %v620 = vld [vmem:[%s5 + $0x30] sm:$0xf]
    %v621 = vld [vmem:[%s5 + $0x34] sm:$0xf]
    %v622 = vld [vmem:[%s5 + $0x38] sm:$0xf]
    %v623 = vld [vmem:[%s5 + $0x3c] sm:$0xf]
    %v624 = vld [vmem:[%s5 + $0x40] sm:$0xf]
    %v625 = vld [vmem:[%s5 + $0x44] sm:$0xf]
    %v626 = vld [vmem:[%s5 + $0x48] sm:$0xf]
    %v627 = vld [vmem:[%s5 + $0x4c] sm:$0xf]
    %v628 = vld [vmem:[%s5 + $0x50] sm:$0xf]
    %v629 = vld [vmem:[%s5 + $0x54] sm:$0xf]
    %v630 = vld [vmem:[%s5 + $0x58] sm:$0xf]
    %v631 = vld [vmem:[%s5 + $0x5c] sm:$0xf]
    %v632 = vld [vmem:[%s5 + $0x60] sm:$0xf]
    %v633 = vld [vmem:[%s5 + $0x64] sm:$0xf]
    %v634 = vld [vmem:[%s5 + $0x68] sm:$0xf]
    %v635 = vld [vmem:[%s5 + $0x6c] sm:$0xf]
    %v636 = vld [vmem:[%s5 + $0x70] sm:$0xf]
    %v637 = vld [vmem:[%s5 + $0x74] sm:$0xf]
    %v638 = vld [vmem:[%s5 + $0x78] sm:$0xf]
    %v639 = vld [vmem:[%s5 + $0x7c] sm:$0xf]
    %v640 = vld [vmem:[#allocation8] sm:$0x1]
    %v642 = vlaneseq
    %v643 = vshrl.u32 %v642, 7
    %v644 = vsub.s32 0, %v643
    %v645 = vrot.slane %v640, %v644
    %v679 = vunpack.c.l.b16 %v608
    %v680 = vunpack.c.l.b16 %v609
    %v681 = vunpack.c.l.b16 %v610
    %v682 = vunpack.c.l.b16 %v611
    %v683 = vunpack.c.l.b16 %v612
    %v684 = vunpack.c.l.b16 %v613
    %v685 = vunpack.c.l.b16 %v614
    %v686 = vunpack.c.l.b16 %v615
    %v687 = vunpack.c.l.b16 %v616
    %v688 = vunpack.c.l.b16 %v617
    %v689 = vunpack.c.l.b16 %v618
    %v690 = vunpack.c.l.b16 %v619
    %v691 = vunpack.c.l.b16 %v620
    %v692 = vunpack.c.l.b16 %v621
    %v693 = vunpack.c.l.b16 %v622
    %v694 = vunpack.c.l.b16 %v623
    %v695 = vunpack.c.l.b16 %v624
    %v696 = vunpack.c.l.b16 %v625
    %v697 = vunpack.c.l.b16 %v626
    %v698 = vunpack.c.l.b16 %v627
    %v699 = vunpack.c.l.b16 %v628
    %v700 = vunpack.c.l.b16 %v629
    %v701 = vunpack.c.l.b16 %v630
    %v702 = vunpack.c.l.b16 %v631
    %v703 = vunpack.c.l.b16 %v632
    %v704 = vunpack.c.l.b16 %v633
    %v705 = vunpack.c.l.b16 %v634
    %v706 = vunpack.c.l.b16 %v635
    %v707 = vunpack.c.l.b16 %v636
    %v708 = vunpack.c.l.b16 %v637
    %v709 = vunpack.c.l.b16 %v638
    %v710 = vunpack.c.l.b16 %v639
    %v711 = vpack.c.b16 %v680, %v679
    %v712 = vpack.c.b16 %v682, %v681
    %v713 = vpack.c.b16 %v684, %v683
    %v714 = vpack.c.b16 %v686, %v685
    %v715 = vpack.c.b16 %v688, %v687
    %v716 = vpack.c.b16 %v690, %v689
    %v717 = vpack.c.b16 %v692, %v691
    %v718 = vpack.c.b16 %v694, %v693
    %v719 = vpack.c.b16 %v696, %v695
    %v720 = vpack.c.b16 %v698, %v697
    %v721 = vpack.c.b16 %v700, %v699
    %v722 = vpack.c.b16 %v702, %v701
    %v723 = vpack.c.b16 %v704, %v703
    %v724 = vpack.c.b16 %v706, %v705
    %v725 = vpack.c.b16 %v708, %v707
    %v726 = vpack.c.b16 %v710, %v709
    %743 = vmatprep.subr.bf16.mxu0 0
    %744 = vmatpush1.bf16.msra.mxu0 %v711
    %745 = vmatprep.subr.bf16.mxu0 0
    %746 = vmatpush1.bf16.msra.mxu0 %v712
    %747 = vmatprep.subr.bf16.mxu0 0
    %748 = vmatpush1.bf16.msra.mxu0 %v713
    %749 = vmatprep.subr.bf16.mxu0 0
    %750 = vmatpush1.bf16.msra.mxu0 %v714
    %751 = vmatprep.subr.bf16.mxu0 0
    %752 = vmatpush1.bf16.msra.mxu0 %v715
    %753 = vmatprep.subr.bf16.mxu0 0
    %754 = vmatpush1.bf16.msra.mxu0 %v716
    %755 = vmatprep.subr.bf16.mxu0 0
    %756 = vmatpush1.bf16.msra.mxu0 %v717
    %757 = vmatprep.subr.bf16.mxu0 0
    %758 = vmatpush1.bf16.msra.mxu0 %v718
    %759 = vmatprep.subr.bf16.mxu0 0
    %760 = vmatpush1.bf16.msra.mxu0 %v719
    %761 = vmatprep.subr.bf16.mxu0 0
    %762 = vmatpush1.bf16.msra.mxu0 %v720
    %763 = vmatprep.subr.bf16.mxu0 0
    %764 = vmatpush1.bf16.msra.mxu0 %v721
    %765 = vmatprep.subr.bf16.mxu0 0
    %766 = vmatpush1.bf16.msra.mxu0 %v722
    %767 = vmatprep.subr.bf16.mxu0 0
    %768 = vmatpush1.bf16.msra.mxu0 %v723
    %769 = vmatprep.subr.bf16.mxu0 0
    %770 = vmatpush1.bf16.msra.mxu0 %v724
    %771 = vmatprep.subr.bf16.mxu0 0
    %772 = vmatpush1.bf16.msra.mxu0 %v725
    %773 = vmatprep.subr.bf16.mxu0 0
    %774 = vmatpush1.bf16.msra.mxu0 %v726
    %775 = vmatprep.mubr.bf16.mxu0 %v607
    %776 = vmatmul.mubr.bf16.gmra.mrb[0].mxu0 %v606
    %v777 = vpop.f32.mrb[0].mxu0
    %v778 = vadd.f32 %v645, %v777
    %v779 = vpop.f32.mrb[0].mxu0
    %v780 = vpop.f32.mrb[0].mxu0
    %v781 = vpop.f32.mrb[0].mxu0
    %782 = vdwg.mxu0
    %v783 = vmax.f32 %v778, 0.0
    %v784 = vpack.c.bf16 %v783, %v783
    %v785 = vld [vmem:[%s7] sm:$0xf]
    %v786 = vld [vmem:[%s7 + $0x4] sm:$0xf]
    %v787 = vld [vmem:[%s7 + $0x8] sm:$0xf]
    %v788 = vld [vmem:[%s7 + $0xc] sm:$0xf]
    %v789 = vld [vmem:[%s7 + $0x10] sm:$0xf]
    %v790 = vld [vmem:[%s7 + $0x14] sm:$0xf]
    %v791 = vld [vmem:[%s7 + $0x18] sm:$0xf]
    %v792 = vld [vmem:[%s7 + $0x1c] sm:$0xf]
    %v793 = vld [vmem:[%s7 + $0x20] sm:$0xf]
    %v794 = vld [vmem:[%s7 + $0x24] sm:$0xf]
    %v795 = vld [vmem:[%s7 + $0x28] sm:$0xf]
    %v796 = vld [vmem:[%s7 + $0x2c] sm:$0xf]
    %v797 = vld [vmem:[%s7 + $0x30] sm:$0xf]
    %v798 = vld [vmem:[%s7 + $0x34] sm:$0xf]
    %v799 = vld [vmem:[%s7 + $0x38] sm:$0xf]
    %v800 = vld [vmem:[%s7 + $0x3c] sm:$0xf]
    %v801 = vld [vmem:[#allocation10] sm:$0x1]
    %v803 = vlaneseq
    %v804 = vshrl.u32 %v803, 7
    %v805 = vsub.s32 0, %v804
    %v806 = vrot.slane %v801, %v805
    %v824 = vunpack.c.l.b16 %v785
    %v825 = vunpack.c.l.b16 %v786
    %v826 = vunpack.c.l.b16 %v787
    %v827 = vunpack.c.l.b16 %v788
    %v828 = vunpack.c.l.b16 %v789
    %v829 = vunpack.c.l.b16 %v790
    %v830 = vunpack.c.l.b16 %v791
    %v831 = vunpack.c.l.b16 %v792
    %v832 = vunpack.c.l.b16 %v793
    %v833 = vunpack.c.l.b16 %v794
    %v834 = vunpack.c.l.b16 %v795
    %v835 = vunpack.c.l.b16 %v796
    %v836 = vunpack.c.l.b16 %v797
    %v837 = vunpack.c.l.b16 %v798
    %v838 = vunpack.c.l.b16 %v799
    %v839 = vunpack.c.l.b16 %v800
    %v840 = vpack.c.b16 %v825, %v824
    %v841 = vpack.c.b16 %v827, %v826
    %v842 = vpack.c.b16 %v829, %v828
    %v843 = vpack.c.b16 %v831, %v830
    %v844 = vpack.c.b16 %v833, %v832
    %v845 = vpack.c.b16 %v835, %v834
    %v846 = vpack.c.b16 %v837, %v836
    %v847 = vpack.c.b16 %v839, %v838
    %856 = vmatprep.subr.bf16.mxu0 0
    %857 = vmatpush1.bf16.msra.mxu0 %v840
    %858 = vmatprep.subr.bf16.mxu0 0
    %859 = vmatpush1.bf16.msra.mxu0 %v841
    %860 = vmatprep.subr.bf16.mxu0 0
    %861 = vmatpush1.bf16.msra.mxu0 %v842
    %862 = vmatprep.subr.bf16.mxu0 0
    %863 = vmatpush1.bf16.msra.mxu0 %v843
    %864 = vmatprep.subr.bf16.mxu0 0
    %865 = vmatpush1.bf16.msra.mxu0 %v844
    %866 = vmatprep.subr.bf16.mxu0 0
    %867 = vmatpush1.bf16.msra.mxu0 %v845
    %868 = vmatprep.subr.bf16.mxu0 0
    %869 = vmatpush1.bf16.msra.mxu0 %v846
    %870 = vmatprep.subr.bf16.mxu0 0
    %871 = vmatpush1.bf16.msra.mxu0 %v847
    %872 = vmatprep.subr.bf16.mxu0 0
    %873 = vmatpush1.bf16.msra.mxu0 0
    %874 = vmatprep.subr.bf16.mxu0 0
    %875 = vmatpush1.bf16.msra.mxu0 0
    %876 = vmatprep.subr.bf16.mxu0 0
    %877 = vmatpush1.bf16.msra.mxu0 0
    %878 = vmatprep.subr.bf16.mxu0 0
    %879 = vmatpush1.bf16.msra.mxu0 0
    %880 = vmatprep.subr.bf16.mxu0 0
    %881 = vmatpush1.bf16.msra.mxu0 0
    %882 = vmatprep.subr.bf16.mxu0 0
    %883 = vmatpush1.bf16.msra.mxu0 0
    %884 = vmatprep.subr.bf16.mxu0 0
    %885 = vmatpush1.bf16.msra.mxu0 0
    %886 = vmatprep.subr.bf16.mxu0 0
    %887 = vmatpush1.bf16.msra.mxu0 0
    %888 = vmatprep.mubr.bf16.mxu0 0
    %889 = vmatmul.mubr.bf16.gmra.mrb[0].mxu0 %v784
    %v890 = vpop.f32.mrb[0].mxu0
    %v891 = vadd.f32 %v806, %v890
    %v892 = vpop.f32.mrb[0].mxu0
    %v893 = vpop.f32.mrb[0].mxu0
    %v894 = vpop.f32.mrb[0].mxu0
    %895 = vdwg.mxu0
    %v896 = vmax.f32 %v891, 0.0
    %vm897 = vcmask 41984
    %898 = vst.msk [vmem:[#allocation11] sm:$0x3] %vm897, %v896
    // Predicated region
    $region58: #{actor_forward.1} parent=1 // pred_check
      _
    $region59: #{actor_forward.1} parent=1 // pred_check_branch
      %900 = sbr.rel (0) target = $region61
    $region60: #{actor_forward.1} parent=1 // pred_region
      %s902 = ssub.s32 32, 32
      %903 = vsyncadd [#allocation4], %s902
      %s905 = sshll.u32 [#allocation11], 4
      %s906 = int_to_ptr.vmem [resolvable:$true] %s905
      %908 = dma.vmem_to_hbm [thread:$0]  %s906, 32, %s9, [#allocation4]
    $region61: #{actor_forward.1} parent=1 // pred_fallthru
      _
    // Predicated region
    $region62: #{actor_forward.1} parent=1 // pred_check
      _
    $region63: #{actor_forward.1} parent=1 // pred_check_branch
      %910 = sbr.rel (0) target = $region65
    $region64: #{actor_forward.1} parent=1 // pred_region
      %911 = dma.done [#allocation4], 32
    $region65: #{actor_forward.1} parent=1 // pred_fallthru
      _
    %912 = vsyncpa [#allocation3], 1
    %913 = vsyncpa [#allocation6], 1
    %914 = vsyncpa [#allocation9], 1
    %915 = vsyncpa [#allocation4], 1

</llo_original>
